<compile_context>
chip_gen: v5e
topology: v5e:2x2
jax: 0.10.0
libtpu: 0.0.40
codegen_flags: <defaults>
</compile_context>

<pallas_src>
import functools

import jax
import jax.numpy as jnp
from jax.experimental import pallas as pl
from jax.experimental.pallas import tpu as pltpu


def _maxpool3_kernel(x_ref, o_ref, *, tile_ho: int, w: int):
    # x_ref: (TILE_B, H_blk, W)   input rows [3m, 3m+2] feed output row m
    # o_ref: (TILE_B, TILE_HO, W) window max stored at lane 3*j + 1
    for m in range(tile_ho):
        r0 = x_ref[:, 3 * m, :]
        r1 = x_ref[:, 3 * m + 1, :]
        r2 = x_ref[:, 3 * m + 2, :]
        h = jnp.maximum(jnp.maximum(r0, r1), r2)  # H-direction VPU max chain
        # W direction: symmetric 3-neighbour max along lanes. Rolling by +1 and
        # by W-1 yields both neighbours regardless of roll sign convention, so
        # lane 3*j+1 holds max(h[3j], h[3j+1], h[3j+2]); valid lanes never touch
        # the circular wrap because 3*j+2 <= 3*Wo-1 <= W-1.
        nb = jnp.maximum(pltpu.roll(h, shift=1, axis=1),
                         pltpu.roll(h, shift=w - 1, axis=1))
        o_ref[:, m, :] = jnp.maximum(h, nb)


def maxpool2d_3x3(x):
    """Equivalent of torch.nn.MaxPool2d(kernel_size=3)(x) for NCHW input."""
    N, C, H, W = x.shape
    K = 3
    Ho = (H - K) // K + 1 if H >= K else 0
    Wo = (W - K) // K + 1 if W >= K else 0
    if Ho <= 0 or Wo <= 0:  # degenerate spatial dims: empty output, skip Pallas
        return jnp.zeros((N, C, max(Ho, 0), max(Wo, 0)), x.dtype)

    B = N * C
    x3 = x.reshape(B, H, W)  # free reshape; W stays on lanes, H on sublanes
    itemsize = jnp.dtype(x.dtype).itemsize

    # ---- Tiling -----------------------------------------------------------
    # Output-row groups: 8 output rows (24 input rows, sublane-aligned block)
    # per grid step when Ho is large enough; otherwise one full-H block
    # (block == full dim is always a legal sublane block).
    if Ho > 8:
        tile_ho = 8
        h_blk = 3 * tile_ho          # 24 -> multiple of 8, legal sublane block
    else:
        tile_ho = Ho
        h_blk = H                    # full dim -> always legal
    grid_h = pl.cdiv(Ho, tile_ho)

    # Batch*channel tile: target ~2 MiB input blocks so that double-buffered
    # input + output blocks stay well under the 32 MiB scoped VMEM limit on
    # every generation (incl. v7x's 64 MiB physical VMEM).
    bytes_per_row = h_blk * W * itemsize
    tile_b = max(1, min(B, (2 * 1024 * 1024) // max(bytes_per_row, 1)))
    if tile_b >= 8:
        tile_b = (tile_b // 8) * 8   # keep sublane dim of loaded taps aligned
    tile_b = min(tile_b, 512)
    grid_b = pl.cdiv(B, tile_b)

    kernel = functools.partial(_maxpool3_kernel, tile_ho=tile_ho, w=W)

    out_full = pl.pallas_call(
        kernel,
        out_shape=jax.ShapeDtypeStruct((B, Ho, W), x.dtype),
        grid=(grid_b, grid_h),
        in_specs=[pl.BlockSpec((tile_b, h_blk, W), lambda i, g: (i, g, 0))],
        out_specs=pl.BlockSpec((tile_b, tile_ho, W), lambda i, g: (i, g, 0)),
        compiler_params=pltpu.CompilerParams(
            dimension_semantics=("parallel", "parallel"),
            vmem_limit_bytes=32 * 1024 * 1024,
        ),
        cost_estimate=pl.CostEstimate(
            flops=8 * B * Ho * W,            # ~8 compares per produced lane
            transcendentals=0,
            bytes_accessed=(B * H * W + B * Ho * W) * itemsize,
        ),
    )(x3)

    # Compact the W direction: window max for output column j lives at lane 3*j+1.
    out = out_full[:, :, 1:3 * Wo:3]
    return out.reshape(N, C, Ho, Wo)


if __name__ == "__main__":
    key = jax.random.PRNGKey(0)
    # Small NCHW input consistent with the module's forward.
    x = jax.random.normal(key, (2, 4, 16, 16), dtype=jnp.float32)

    out = jax.block_until_ready(maxpool2d_3x3(x))

    # Reference check with pure JAX (same semantics as nn.MaxPool2d(3)).
    ref = jax.lax.reduce_window(
        x,
        -jnp.inf,
        jax.lax.max,
        window_dimensions=(1, 1, 3, 3),
        window_strides=(1, 1, 3, 3),
        padding="VALID",
    )
    assert out.shape == (2, 4, 5, 5), out.shape
    assert jnp.allclose(out, ref), "Pallas maxpool result mismatch vs reference"

    print("KERNEL_OK")
</pallas_src>

<mosaic_0001>
module attributes {stable_mosaic.version = 11 : i64} {
  func.func @_maxpool3_kernel(%arg0: i32, %arg1: i32, %arg2: memref<8x16x16xf32, #tpu.memory_space<vmem>>, %arg3: memref<8x5x16xf32, #tpu.memory_space<vmem>>) attributes {dimension_semantics = [#tpu.dimension_semantics<parallel>, #tpu.dimension_semantics<parallel>], iteration_bounds = array<i64: 1, 1>, scalar_prefetch = 0 : i64, scratch_operands = 0 : i64, tpu.core_type = #tpu.core_type<tc>, window_params = [{transform_indices = @transform_0, window_bounds = array<i64: 8, 16, 16>}, {transform_indices = @transform_1, window_bounds = array<i64: 8, 5, 16>}]} {
    %c0 = arith.constant 0 : index
    %c0_0 = arith.constant 0 : index
    %c0_1 = arith.constant 0 : index
    %0 = vector.load %arg2[%c0, %c0_0, %c0_1] : memref<8x16x16xf32, #tpu.memory_space<vmem>>, vector<8x1x16xf32>
    %1 = vector.shape_cast %0 : vector<8x1x16xf32> to vector<8x16xf32>
    %c0_2 = arith.constant 0 : index
    %c1 = arith.constant 1 : index
    %c0_3 = arith.constant 0 : index
    %2 = vector.load %arg2[%c0_2, %c1, %c0_3] : memref<8x16x16xf32, #tpu.memory_space<vmem>>, vector<8x1x16xf32>
    %3 = vector.shape_cast %2 : vector<8x1x16xf32> to vector<8x16xf32>
    %c0_4 = arith.constant 0 : index
    %c2 = arith.constant 2 : index
    %c0_5 = arith.constant 0 : index
    %4 = vector.load %arg2[%c0_4, %c2, %c0_5] : memref<8x16x16xf32, #tpu.memory_space<vmem>>, vector<8x1x16xf32>
    %5 = vector.shape_cast %4 : vector<8x1x16xf32> to vector<8x16xf32>
    %6 = arith.maximumf %1, %3 : vector<8x16xf32>
    %7 = arith.maximumf %6, %5 : vector<8x16xf32>
    %c1_i32 = arith.constant 1 : i32
    %8 = tpu.dynamic_rotate %7 by %c1_i32 dim 1 : vector<8x16xf32>, i32 -> vector<8x16xf32>
    %c15_i32 = arith.constant 15 : i32
    %9 = tpu.dynamic_rotate %7 by %c15_i32 dim 1 : vector<8x16xf32>, i32 -> vector<8x16xf32>
    %10 = arith.maximumf %8, %9 : vector<8x16xf32>
    %11 = arith.maximumf %7, %10 : vector<8x16xf32>
    %c0_6 = arith.constant 0 : index
    %c0_7 = arith.constant 0 : index
    %c0_8 = arith.constant 0 : index
    %12 = vector.load %arg3[%c0_6, %c0_7, %c0_8] : memref<8x5x16xf32, #tpu.memory_space<vmem>>, vector<8x1x16xf32>
    %13 = vector.shape_cast %12 : vector<8x1x16xf32> to vector<8x16xf32>
    %14 = vector.shape_cast %11 : vector<8x16xf32> to vector<8x1x16xf32>
    tpu.vector_store %arg3[%c0_6, %c0_7, %c0_8], %14 {strides = array<i32>} : memref<8x5x16xf32, #tpu.memory_space<vmem>>, vector<8x1x16xf32>,
    %c0_9 = arith.constant 0 : index
    %c3 = arith.constant 3 : index
    %c0_10 = arith.constant 0 : index
    %15 = vector.load %arg2[%c0_9, %c3, %c0_10] : memref<8x16x16xf32, #tpu.memory_space<vmem>>, vector<8x1x16xf32>
    %16 = vector.shape_cast %15 : vector<8x1x16xf32> to vector<8x16xf32>
    %c0_11 = arith.constant 0 : index
    %c4 = arith.constant 4 : index
    %c0_12 = arith.constant 0 : index
    %17 = vector.load %arg2[%c0_11, %c4, %c0_12] : memref<8x16x16xf32, #tpu.memory_space<vmem>>, vector<8x1x16xf32>
    %18 = vector.shape_cast %17 : vector<8x1x16xf32> to vector<8x16xf32>
    %c0_13 = arith.constant 0 : index
    %c5 = arith.constant 5 : index
    %c0_14 = arith.constant 0 : index
    %19 = vector.load %arg2[%c0_13, %c5, %c0_14] : memref<8x16x16xf32, #tpu.memory_space<vmem>>, vector<8x1x16xf32>
    %20 = vector.shape_cast %19 : vector<8x1x16xf32> to vector<8x16xf32>
    %21 = arith.maximumf %16, %18 : vector<8x16xf32>
    %22 = arith.maximumf %21, %20 : vector<8x16xf32>
    %c1_i32_15 = arith.constant 1 : i32
    %23 = tpu.dynamic_rotate %22 by %c1_i32_15 dim 1 : vector<8x16xf32>, i32 -> vector<8x16xf32>
    %c15_i32_16 = arith.constant 15 : i32
    %24 = tpu.dynamic_rotate %22 by %c15_i32_16 dim 1 : vector<8x16xf32>, i32 -> vector<8x16xf32>
    %25 = arith.maximumf %23, %24 : vector<8x16xf32>
    %26 = arith.maximumf %22, %25 : vector<8x16xf32>
    %c0_17 = arith.constant 0 : index
    %c1_18 = arith.constant 1 : index
    %c0_19 = arith.constant 0 : index
    %27 = vector.load %arg3[%c0_17, %c1_18, %c0_19] : memref<8x5x16xf32, #tpu.memory_space<vmem>>, vector<8x1x16xf32>
    %28 = vector.shape_cast %27 : vector<8x1x16xf32> to vector<8x16xf32>
    %29 = vector.shape_cast %26 : vector<8x16xf32> to vector<8x1x16xf32>
    tpu.vector_store %arg3[%c0_17, %c1_18, %c0_19], %29 {strides = array<i32>} : memref<8x5x16xf32, #tpu.memory_space<vmem>>, vector<8x1x16xf32>,
    %c0_20 = arith.constant 0 : index
    %c6 = arith.constant 6 : index
    %c0_21 = arith.constant 0 : index
    %30 = vector.load %arg2[%c0_20, %c6, %c0_21] : memref<8x16x16xf32, #tpu.memory_space<vmem>>, vector<8x1x16xf32>
    %31 = vector.shape_cast %30 : vector<8x1x16xf32> to vector<8x16xf32>
    %c0_22 = arith.constant 0 : index
    %c7 = arith.constant 7 : index
    %c0_23 = arith.constant 0 : index
    %32 = vector.load %arg2[%c0_22, %c7, %c0_23] : memref<8x16x16xf32, #tpu.memory_space<vmem>>, vector<8x1x16xf32>
    %33 = vector.shape_cast %32 : vector<8x1x16xf32> to vector<8x16xf32>
    %c0_24 = arith.constant 0 : index
    %c8 = arith.constant 8 : index
    %c0_25 = arith.constant 0 : index
    %34 = vector.load %arg2[%c0_24, %c8, %c0_25] : memref<8x16x16xf32, #tpu.memory_space<vmem>>, vector<8x1x16xf32>
    %35 = vector.shape_cast %34 : vector<8x1x16xf32> to vector<8x16xf32>
    %36 = arith.maximumf %31, %33 : vector<8x16xf32>
    %37 = arith.maximumf %36, %35 : vector<8x16xf32>
    %c1_i32_26 = arith.constant 1 : i32
    %38 = tpu.dynamic_rotate %37 by %c1_i32_26 dim 1 : vector<8x16xf32>, i32 -> vector<8x16xf32>
    %c15_i32_27 = arith.constant 15 : i32
    %39 = tpu.dynamic_rotate %37 by %c15_i32_27 dim 1 : vector<8x16xf32>, i32 -> vector<8x16xf32>
    %40 = arith.maximumf %38, %39 : vector<8x16xf32>
    %41 = arith.maximumf %37, %40 : vector<8x16xf32>
    %c0_28 = arith.constant 0 : index
    %c2_29 = arith.constant 2 : index
    %c0_30 = arith.constant 0 : index
    %42 = vector.load %arg3[%c0_28, %c2_29, %c0_30] : memref<8x5x16xf32, #tpu.memory_space<vmem>>, vector<8x1x16xf32>
    %43 = vector.shape_cast %42 : vector<8x1x16xf32> to vector<8x16xf32>
    %44 = vector.shape_cast %41 : vector<8x16xf32> to vector<8x1x16xf32>
    tpu.vector_store %arg3[%c0_28, %c2_29, %c0_30], %44 {strides = array<i32>} : memref<8x5x16xf32, #tpu.memory_space<vmem>>, vector<8x1x16xf32>,
    %c0_31 = arith.constant 0 : index
    %c9 = arith.constant 9 : index
    %c0_32 = arith.constant 0 : index
    %45 = vector.load %arg2[%c0_31, %c9, %c0_32] : memref<8x16x16xf32, #tpu.memory_space<vmem>>, vector<8x1x16xf32>
    %46 = vector.shape_cast %45 : vector<8x1x16xf32> to vector<8x16xf32>
    %c0_33 = arith.constant 0 : index
    %c10 = arith.constant 10 : index
    %c0_34 = arith.constant 0 : index
    %47 = vector.load %arg2[%c0_33, %c10, %c0_34] : memref<8x16x16xf32, #tpu.memory_space<vmem>>, vector<8x1x16xf32>
    %48 = vector.shape_cast %47 : vector<8x1x16xf32> to vector<8x16xf32>
    %c0_35 = arith.constant 0 : index
    %c11 = arith.constant 11 : index
    %c0_36 = arith.constant 0 : index
    %49 = vector.load %arg2[%c0_35, %c11, %c0_36] : memref<8x16x16xf32, #tpu.memory_space<vmem>>, vector<8x1x16xf32>
    %50 = vector.shape_cast %49 : vector<8x1x16xf32> to vector<8x16xf32>
    %51 = arith.maximumf %46, %48 : vector<8x16xf32>
    %52 = arith.maximumf %51, %50 : vector<8x16xf32>
    %c1_i32_37 = arith.constant 1 : i32
    %53 = tpu.dynamic_rotate %52 by %c1_i32_37 dim 1 : vector<8x16xf32>, i32 -> vector<8x16xf32>
    %c15_i32_38 = arith.constant 15 : i32
    %54 = tpu.dynamic_rotate %52 by %c15_i32_38 dim 1 : vector<8x16xf32>, i32 -> vector<8x16xf32>
    %55 = arith.maximumf %53, %54 : vector<8x16xf32>
    %56 = arith.maximumf %52, %55 : vector<8x16xf32>
    %c0_39 = arith.constant 0 : index
    %c3_40 = arith.constant 3 : index
    %c0_41 = arith.constant 0 : index
    %57 = vector.load %arg3[%c0_39, %c3_40, %c0_41] : memref<8x5x16xf32, #tpu.memory_space<vmem>>, vector<8x1x16xf32>
    %58 = vector.shape_cast %57 : vector<8x1x16xf32> to vector<8x16xf32>
    %59 = vector.shape_cast %56 : vector<8x16xf32> to vector<8x1x16xf32>
    tpu.vector_store %arg3[%c0_39, %c3_40, %c0_41], %59 {strides = array<i32>} : memref<8x5x16xf32, #tpu.memory_space<vmem>>, vector<8x1x16xf32>,
    %c0_42 = arith.constant 0 : index
    %c12 = arith.constant 12 : index
    %c0_43 = arith.constant 0 : index
    %60 = vector.load %arg2[%c0_42, %c12, %c0_43] : memref<8x16x16xf32, #tpu.memory_space<vmem>>, vector<8x1x16xf32>
    %61 = vector.shape_cast %60 : vector<8x1x16xf32> to vector<8x16xf32>
    %c0_44 = arith.constant 0 : index
    %c13 = arith.constant 13 : index
    %c0_45 = arith.constant 0 : index
    %62 = vector.load %arg2[%c0_44, %c13, %c0_45] : memref<8x16x16xf32, #tpu.memory_space<vmem>>, vector<8x1x16xf32>
    %63 = vector.shape_cast %62 : vector<8x1x16xf32> to vector<8x16xf32>
    %c0_46 = arith.constant 0 : index
    %c14 = arith.constant 14 : index
    %c0_47 = arith.constant 0 : index
    %64 = vector.load %arg2[%c0_46, %c14, %c0_47] : memref<8x16x16xf32, #tpu.memory_space<vmem>>, vector<8x1x16xf32>
    %65 = vector.shape_cast %64 : vector<8x1x16xf32> to vector<8x16xf32>
    %66 = arith.maximumf %61, %63 : vector<8x16xf32>
    %67 = arith.maximumf %66, %65 : vector<8x16xf32>
    %c1_i32_48 = arith.constant 1 : i32
    %68 = tpu.dynamic_rotate %67 by %c1_i32_48 dim 1 : vector<8x16xf32>, i32 -> vector<8x16xf32>
    %c15_i32_49 = arith.constant 15 : i32
    %69 = tpu.dynamic_rotate %67 by %c15_i32_49 dim 1 : vector<8x16xf32>, i32 -> vector<8x16xf32>
    %70 = arith.maximumf %68, %69 : vector<8x16xf32>
    %71 = arith.maximumf %67, %70 : vector<8x16xf32>
    %c0_50 = arith.constant 0 : index
    %c4_51 = arith.constant 4 : index
    %c0_52 = arith.constant 0 : index
    %72 = vector.load %arg3[%c0_50, %c4_51, %c0_52] : memref<8x5x16xf32, #tpu.memory_space<vmem>>, vector<8x1x16xf32>
    %73 = vector.shape_cast %72 : vector<8x1x16xf32> to vector<8x16xf32>
    %74 = vector.shape_cast %71 : vector<8x16xf32> to vector<8x1x16xf32>
    tpu.vector_store %arg3[%c0_50, %c4_51, %c0_52], %74 {strides = array<i32>} : memref<8x5x16xf32, #tpu.memory_space<vmem>>, vector<8x1x16xf32>,
    return
  }
  func.func @transform_0(%arg0: i32, %arg1: i32) -> (i32, i32, i32) {
    %c0_i32 = arith.constant 0 : i32
    %c0_i32_0 = arith.constant 0 : i32
    return %arg0, %arg1, %c0_i32 : i32, i32, i32
  }
  func.func @transform_1(%arg0: i32, %arg1: i32) -> (i32, i32, i32) {
    %c0_i32 = arith.constant 0 : i32
    %c0_i32_0 = arith.constant 0 : i32
    return %arg0, %arg1, %c0_i32 : i32, i32, i32
  }
}

</mosaic_0001>

<llo_original>
// kernel: tpu_custom_call.1
$region0: #{tpu_custom_call.1}
  #allocation0 [shape = 'u32[]', space=smem, size = 0x4, offset = 0x4, fixed_abs, tag = 'smem constant byte address 0x4 - core index']
  #allocation1 [shape = 'u32[72,128]{1,0:T(1,128)}', space=vmem, size = 0x9000, scoped, tag = 'internal scratch']
  %s0 = inlined_call_operand.hbm [shape: f32[8,16,16], index: 0, kind: input, shape index: {}]
  %s1 = inlined_call_operand.vmem [shape: f32[8,5,16], index: 1, kind: output, shape index: {}]
  %s2 = sld [smem:[#allocation0]]
  $region18: #{tpu_custom_call.1} parent=0
    _
  %s4 = ssub.s32 1, %s2
  %s5 = scalar_select 0, %s4, %s2
  $region1: #{tpu_custom_call.1} parent=0
    #allocation2 [shape = 'u8[65536]{0}', space=vmem, size = 0x10000, scoped, tag = 'input window, operand 0, single buffered']
    #allocation3 [shape = 's32[1]{0}', space=sflag, size = 0x4, scoped, tag = 'scoped memory for tpu_custom_call.1']
    %6 = vsyncpa [#allocation3], 0
    // Predicated region
    $region2: #{tpu_custom_call.1} parent=1 // pred_check
      _
    $region3: #{tpu_custom_call.1} parent=1 // pred_check_branch
      %8 = sbr.rel (0) target = $region5
    $region4: #{tpu_custom_call.1} parent=1 // pred_region
      %10 = vsyncadd [#allocation3], 0
      %s11 = sshll.u32 %s0, 4
      %s12 = int_to_ptr.hbm [resolvable:$true] %s11
      %s13 = sshll.u32 [#allocation2], 4
      %s14 = int_to_ptr.vmem [resolvable:$true] %s13
      %19 = dma.hbm_to_vmem [thread:$0]  %s12, 2048, %s14, [#allocation3], 128, 128, 8
    $region5: #{tpu_custom_call.1} parent=1 // pred_fallthru
      _
    // Predicated region
    $region6: #{tpu_custom_call.1} parent=1 // pred_check
      _
    $region7: #{tpu_custom_call.1} parent=1 // pred_check_branch
      %21 = sbr.rel (0) target = $region9
    $region8: #{tpu_custom_call.1} parent=1 // pred_region
      %23 = dma.done [#allocation3], 2048
    $region9: #{tpu_custom_call.1} parent=1 // pred_fallthru
      _
    %v24 = vld [vmem:[#allocation2] sm:$0x1]
    %v25 = vld [vmem:[#allocation2 + $0x10] sm:$0x1]
    %v26 = vld [vmem:[#allocation2 + $0x20] sm:$0x1]
    %v27 = vld [vmem:[#allocation2 + $0x30] sm:$0x1]
    %v28 = vld [vmem:[#allocation2 + $0x40] sm:$0x1]
    %v29 = vld [vmem:[#allocation2 + $0x50] sm:$0x1]
    %v30 = vld [vmem:[#allocation2 + $0x60] sm:$0x1]
    %v31 = vld [vmem:[#allocation2 + $0x70] sm:$0x1]
    %v32 = vld [vmem:[#allocation2 + $0x1] sm:$0x1]
    %v33 = vld [vmem:[#allocation2 + $0x11] sm:$0x1]
    %v34 = vld [vmem:[#allocation2 + $0x21] sm:$0x1]
    %v35 = vld [vmem:[#allocation2 + $0x31] sm:$0x1]
    %v36 = vld [vmem:[#allocation2 + $0x41] sm:$0x1]
    %v37 = vld [vmem:[#allocation2 + $0x51] sm:$0x1]
    %v38 = vld [vmem:[#allocation2 + $0x61] sm:$0x1]
    %v39 = vld [vmem:[#allocation2 + $0x71] sm:$0x1]
    %v40 = vld [vmem:[#allocation2 + $0x2] sm:$0x1]
    %v41 = vld [vmem:[#allocation2 + $0x12] sm:$0x1]
    %v42 = vld [vmem:[#allocation2 + $0x22] sm:$0x1]
    %v43 = vld [vmem:[#allocation2 + $0x32] sm:$0x1]
    %v44 = vld [vmem:[#allocation2 + $0x42] sm:$0x1]
    %v45 = vld [vmem:[#allocation2 + $0x52] sm:$0x1]
    %v46 = vld [vmem:[#allocation2 + $0x62] sm:$0x1]
    %v47 = vld [vmem:[#allocation2 + $0x72] sm:$0x1]
    %v48 = vmax.f32 %v24, %v32
    %v49 = vmax.f32 %v25, %v33
    %v50 = vmax.f32 %v26, %v34
    %v51 = vmax.f32 %v27, %v35
    %v52 = vmax.f32 %v28, %v36
    %v53 = vmax.f32 %v29, %v37
    %v54 = vmax.f32 %v30, %v38
    %v55 = vmax.f32 %v31, %v39
    %v56 = vmax.f32 %v48, %v40
    %v57 = vmax.f32 %v49, %v41
    %v58 = vmax.f32 %v50, %v42
    %v59 = vmax.f32 %v51, %v43
    %v60 = vmax.f32 %v52, %v44
    %v61 = vmax.f32 %v53, %v45
    %v62 = vmax.f32 %v54, %v46
    %v63 = vmax.f32 %v55, %v47
    %v72 = vrot.slane %v57, 7
    %vm73 = vcmask 1041409
    %v74 = vsel %vm73, %v72, %v56
    %v75 = vrot.slane %v58, 6
    %vm76 = vcmask 1042434
    %v77 = vsel %vm76, %v75, %v74
    %v78 = vrot.slane %v59, 5
    %vm79 = vcmask 1043459
    %v80 = vsel %vm79, %v78, %v77
    %v81 = vrot.slane %v60, 4
    %vm82 = vcmask 1044484
    %v83 = vsel %vm82, %v81, %v80
    %v84 = vrot.slane %v61, 3
    %vm85 = vcmask 1045509
    %v86 = vsel %vm85, %v84, %v83
    %v87 = vrot.slane %v62, 2
    %vm88 = vcmask 1046534
    %v89 = vsel %vm88, %v87, %v86
    %v90 = vrot.slane %v63, 1
    %vm91 = vcmask 1047559
    %v92 = vsel %vm91, %v90, %v89
    %vm94 = vcmask 1047680
    %95 = vrot.lane.b32.xlu0 %v92, 16
    %v96 = vpop.permute.xlu0 %95
    %v97 = vsel %vm94, %v96, %v92
    %98 = vrot.lane.b32.xlu0 %v97, 16
    %v99 = vpop.permute.xlu0 %98
    %v100 = vsel %vm94, %v99, %v92
    %102 = vrot.lane.b32.xlu0 %v100, 14
    %v103 = vpop.permute.xlu0 %102
    %v105 = vmax.f32 %v100, %v103
    %v107 = vrot.slane %v105, 1
    %v108 = vrot.slane %v105, 2
    %v109 = vrot.slane %v105, 3
    %v110 = vrot.slane %v105, 4
    %v111 = vrot.slane %v105, 5
    %v112 = vrot.slane %v105, 6
    %v113 = vrot.slane %v105, 7
    %114 = vrot.lane.b32.xlu0 %v105, 113
    %v115 = vpop.permute.xlu0 %114
    %116 = vrot.lane.b32.xlu0 %v107, 113
    %v117 = vpop.permute.xlu0 %116
    %118 = vrot.lane.b32.xlu0 %v108, 113
    %v119 = vpop.permute.xlu0 %118
    %120 = vrot.lane.b32.xlu0 %v109, 113
    %v121 = vpop.permute.xlu0 %120
    %122 = vrot.lane.b32.xlu0 %v110, 113
    %v123 = vpop.permute.xlu0 %122
    %124 = vrot.lane.b32.xlu0 %v111, 113
    %v125 = vpop.permute.xlu0 %124
    %126 = vrot.lane.b32.xlu0 %v112, 113
    %v127 = vpop.permute.xlu0 %126
    %128 = vrot.lane.b32.xlu0 %v113, 113
    %v129 = vpop.permute.xlu0 %128
    %v138 = vmax.f32 %v56, %v115
    %v139 = vmax.f32 %v57, %v117
    %v140 = vmax.f32 %v58, %v119
    %v141 = vmax.f32 %v59, %v121
    %v142 = vmax.f32 %v60, %v123
    %v143 = vmax.f32 %v61, %v125
    %v144 = vmax.f32 %v62, %v127
    %v145 = vmax.f32 %v63, %v129
    %vm146 = vcmask 122880
    %147 = vst.msk [vmem:[%s1] sm:$0x1] %vm146, %v138
    %148 = vst.msk [vmem:[%s1 + $0x8] sm:$0x1] %vm146, %v139
    %149 = vst.msk [vmem:[%s1 + $0x10] sm:$0x1] %vm146, %v140
    %150 = vst.msk [vmem:[%s1 + $0x18] sm:$0x1] %vm146, %v141
    %151 = vst.msk [vmem:[%s1 + $0x20] sm:$0x1] %vm146, %v142
    %152 = vst.msk [vmem:[%s1 + $0x28] sm:$0x1] %vm146, %v143
    %153 = vst.msk [vmem:[%s1 + $0x30] sm:$0x1] %vm146, %v144
    %154 = vst.msk [vmem:[%s1 + $0x38] sm:$0x1] %vm146, %v145
    %v155 = vld [vmem:[#allocation2 + $0x3] sm:$0x1]
    %v156 = vld [vmem:[#allocation2 + $0x13] sm:$0x1]
    %v157 = vld [vmem:[#allocation2 + $0x23] sm:$0x1]
    %v158 = vld [vmem:[#allocation2 + $0x33] sm:$0x1]
    %v159 = vld [vmem:[#allocation2 + $0x43] sm:$0x1]
    %v160 = vld [vmem:[#allocation2 + $0x53] sm:$0x1]
    %v161 = vld [vmem:[#allocation2 + $0x63] sm:$0x1]
    %v162 = vld [vmem:[#allocation2 + $0x73] sm:$0x1]
    %v163 = vld [vmem:[#allocation2 + $0x4] sm:$0x1]
    %v164 = vld [vmem:[#allocation2 + $0x14] sm:$0x1]
    %v165 = vld [vmem:[#allocation2 + $0x24] sm:$0x1]
    %v166 = vld [vmem:[#allocation2 + $0x34] sm:$0x1]
    %v167 = vld [vmem:[#allocation2 + $0x44] sm:$0x1]
    %v168 = vld [vmem:[#allocation2 + $0x54] sm:$0x1]
    %v169 = vld [vmem:[#allocation2 + $0x64] sm:$0x1]
    %v170 = vld [vmem:[#allocation2 + $0x74] sm:$0x1]
    %v171 = vld [vmem:[#allocation2 + $0x5] sm:$0x1]
    %v172 = vld [vmem:[#allocation2 + $0x15] sm:$0x1]
    %v173 = vld [vmem:[#allocation2 + $0x25] sm:$0x1]
    %v174 = vld [vmem:[#allocation2 + $0x35] sm:$0x1]
    %v175 = vld [vmem:[#allocation2 + $0x45] sm:$0x1]
    %v176 = vld [vmem:[#allocation2 + $0x55] sm:$0x1]
    %v177 = vld [vmem:[#allocation2 + $0x65] sm:$0x1]
    %v178 = vld [vmem:[#allocation2 + $0x75] sm:$0x1]
    %v179 = vmax.f32 %v155, %v163
    %v180 = vmax.f32 %v156, %v164
    %v181 = vmax.f32 %v157, %v165
    %v182 = vmax.f32 %v158, %v166
    %v183 = vmax.f32 %v159, %v167
    %v184 = vmax.f32 %v160, %v168
    %v185 = vmax.f32 %v161, %v169
    %v186 = vmax.f32 %v162, %v170
    %v187 = vmax.f32 %v179, %v171
    %v188 = vmax.f32 %v180, %v172
    %v189 = vmax.f32 %v181, %v173
    %v190 = vmax.f32 %v182, %v174
    %v191 = vmax.f32 %v183, %v175
    %v192 = vmax.f32 %v184, %v176
    %v193 = vmax.f32 %v185, %v177
    %v194 = vmax.f32 %v186, %v178
    %v203 = vrot.slane %v188, 7
    %v204 = vsel %vm73, %v203, %v187
    %v205 = vrot.slane %v189, 6
    %v206 = vsel %vm76, %v205, %v204
    %v207 = vrot.slane %v190, 5
    %v208 = vsel %vm79, %v207, %v206
    %v209 = vrot.slane %v191, 4
    %v210 = vsel %vm82, %v209, %v208
    %v211 = vrot.slane %v192, 3
    %v212 = vsel %vm85, %v211, %v210
    %v213 = vrot.slane %v193, 2
    %v214 = vsel %vm88, %v213, %v212
    %v215 = vrot.slane %v194, 1
    %v216 = vsel %vm91, %v215, %v214
    %218 = vrot.lane.b32.xlu0 %v216, 16
    %v219 = vpop.permute.xlu0 %218
    %v220 = vsel %vm94, %v219, %v216
    %221 = vrot.lane.b32.xlu0 %v220, 16
    %v222 = vpop.permute.xlu0 %221
    %v223 = vsel %vm94, %v222, %v216
    %225 = vrot.lane.b32.xlu0 %v223, 14
    %v226 = vpop.permute.xlu0 %225
    %v228 = vmax.f32 %v223, %v226
    %v230 = vrot.slane %v228, 1
    %v231 = vrot.slane %v228, 2
    %v232 = vrot.slane %v228, 3
    %v233 = vrot.slane %v228, 4
    %v234 = vrot.slane %v228, 5
    %v235 = vrot.slane %v228, 6
    %v236 = vrot.slane %v228, 7
    %237 = vrot.lane.b32.xlu0 %v228, 113
    %v238 = vpop.permute.xlu0 %237
    %239 = vrot.lane.b32.xlu0 %v230, 113
    %v240 = vpop.permute.xlu0 %239
    %241 = vrot.lane.b32.xlu0 %v231, 113
    %v242 = vpop.permute.xlu0 %241
    %243 = vrot.lane.b32.xlu0 %v232, 113
    %v244 = vpop.permute.xlu0 %243
    %245 = vrot.lane.b32.xlu0 %v233, 113
    %v246 = vpop.permute.xlu0 %245
    %247 = vrot.lane.b32.xlu0 %v234, 113
    %v248 = vpop.permute.xlu0 %247
    %249 = vrot.lane.b32.xlu0 %v235, 113
    %v250 = vpop.permute.xlu0 %249
    %251 = vrot.lane.b32.xlu0 %v236, 113
    %v252 = vpop.permute.xlu0 %251
    %v261 = vmax.f32 %v187, %v238
    %v262 = vmax.f32 %v188, %v240
    %v263 = vmax.f32 %v189, %v242
    %v264 = vmax.f32 %v190, %v244
    %v265 = vmax.f32 %v191, %v246
    %v266 = vmax.f32 %v192, %v248
    %v267 = vmax.f32 %v193, %v250
    %v268 = vmax.f32 %v194, %v252
    %269 = vst.msk [vmem:[%s1 + $0x1] sm:$0x1] %vm146, %v261
    %270 = vst.msk [vmem:[%s1 + $0x9] sm:$0x1] %vm146, %v262
    %271 = vst.msk [vmem:[%s1 + $0x11] sm:$0x1] %vm146, %v263
    %272 = vst.msk [vmem:[%s1 + $0x19] sm:$0x1] %vm146, %v264
    %273 = vst.msk [vmem:[%s1 + $0x21] sm:$0x1] %vm146, %v265
    %274 = vst.msk [vmem:[%s1 + $0x29] sm:$0x1] %vm146, %v266
    %275 = vst.msk [vmem:[%s1 + $0x31] sm:$0x1] %vm146, %v267
    %276 = vst.msk [vmem:[%s1 + $0x39] sm:$0x1] %vm146, %v268
    %v277 = vld [vmem:[#allocation2 + $0x6] sm:$0x1]
    %v278 = vld [vmem:[#allocation2 + $0x16] sm:$0x1]
    %v279 = vld [vmem:[#allocation2 + $0x26] sm:$0x1]
    %v280 = vld [vmem:[#allocation2 + $0x36] sm:$0x1]
    %v281 = vld [vmem:[#allocation2 + $0x46] sm:$0x1]
    %v282 = vld [vmem:[#allocation2 + $0x56] sm:$0x1]
    %v283 = vld [vmem:[#allocation2 + $0x66] sm:$0x1]
    %v284 = vld [vmem:[#allocation2 + $0x76] sm:$0x1]
    %v285 = vld [vmem:[#allocation2 + $0x7] sm:$0x1]
    %v286 = vld [vmem:[#allocation2 + $0x17] sm:$0x1]
    %v287 = vld [vmem:[#allocation2 + $0x27] sm:$0x1]
    %v288 = vld [vmem:[#allocation2 + $0x37] sm:$0x1]
    %v289 = vld [vmem:[#allocation2 + $0x47] sm:$0x1]
    %v290 = vld [vmem:[#allocation2 + $0x57] sm:$0x1]
    %v291 = vld [vmem:[#allocation2 + $0x67] sm:$0x1]
    %v292 = vld [vmem:[#allocation2 + $0x77] sm:$0x1]
    %v293 = vld [vmem:[#allocation2 + $0x8] sm:$0x1]
    %v294 = vld [vmem:[#allocation2 + $0x18] sm:$0x1]
    %v295 = vld [vmem:[#allocation2 + $0x28] sm:$0x1]
    %v296 = vld [vmem:[#allocation2 + $0x38] sm:$0x1]
    %v297 = vld [vmem:[#allocation2 + $0x48] sm:$0x1]
    %v298 = vld [vmem:[#allocation2 + $0x58] sm:$0x1]
    %v299 = vld [vmem:[#allocation2 + $0x68] sm:$0x1]
    %v300 = vld [vmem:[#allocation2 + $0x78] sm:$0x1]
    %v301 = vmax.f32 %v277, %v285
    %v302 = vmax.f32 %v278, %v286
    %v303 = vmax.f32 %v279, %v287
    %v304 = vmax.f32 %v280, %v288
    %v305 = vmax.f32 %v281, %v289
    %v306 = vmax.f32 %v282, %v290
    %v307 = vmax.f32 %v283, %v291
    %v308 = vmax.f32 %v284, %v292
    %v309 = vmax.f32 %v301, %v293
    %v310 = vmax.f32 %v302, %v294
    %v311 = vmax.f32 %v303, %v295
    %v312 = vmax.f32 %v304, %v296
    %v313 = vmax.f32 %v305, %v297
    %v314 = vmax.f32 %v306, %v298
    %v315 = vmax.f32 %v307, %v299
    %v316 = vmax.f32 %v308, %v300
    %v325 = vrot.slane %v310, 7
    %v326 = vsel %vm73, %v325, %v309
    %v327 = vrot.slane %v311, 6
    %v328 = vsel %vm76, %v327, %v326
    %v329 = vrot.slane %v312, 5
    %v330 = vsel %vm79, %v329, %v328
    %v331 = vrot.slane %v313, 4
    %v332 = vsel %vm82, %v331, %v330
    %v333 = vrot.slane %v314, 3
    %v334 = vsel %vm85, %v333, %v332
    %v335 = vrot.slane %v315, 2
    %v336 = vsel %vm88, %v335, %v334
    %v337 = vrot.slane %v316, 1
    %v338 = vsel %vm91, %v337, %v336
    %340 = vrot.lane.b32.xlu0 %v338, 16
    %v341 = vpop.permute.xlu0 %340
    %v342 = vsel %vm94, %v341, %v338
    %343 = vrot.lane.b32.xlu0 %v342, 16
    %v344 = vpop.permute.xlu0 %343
    %v345 = vsel %vm94, %v344, %v338
    %347 = vrot.lane.b32.xlu0 %v345, 14
    %v348 = vpop.permute.xlu0 %347
    %v350 = vmax.f32 %v345, %v348
    %v352 = vrot.slane %v350, 1
    %v353 = vrot.slane %v350, 2
    %v354 = vrot.slane %v350, 3
    %v355 = vrot.slane %v350, 4
    %v356 = vrot.slane %v350, 5
    %v357 = vrot.slane %v350, 6
    %v358 = vrot.slane %v350, 7
    %359 = vrot.lane.b32.xlu0 %v350, 113
    %v360 = vpop.permute.xlu0 %359
    %361 = vrot.lane.b32.xlu0 %v352, 113
    %v362 = vpop.permute.xlu0 %361
    %363 = vrot.lane.b32.xlu0 %v353, 113
    %v364 = vpop.permute.xlu0 %363
    %365 = vrot.lane.b32.xlu0 %v354, 113
    %v366 = vpop.permute.xlu0 %365
    %367 = vrot.lane.b32.xlu0 %v355, 113
    %v368 = vpop.permute.xlu0 %367
    %369 = vrot.lane.b32.xlu0 %v356, 113
    %v370 = vpop.permute.xlu0 %369
    %371 = vrot.lane.b32.xlu0 %v357, 113
    %v372 = vpop.permute.xlu0 %371
    %373 = vrot.lane.b32.xlu0 %v358, 113
    %v374 = vpop.permute.xlu0 %373
    %v383 = vmax.f32 %v309, %v360
    %v384 = vmax.f32 %v310, %v362
    %v385 = vmax.f32 %v311, %v364
    %v386 = vmax.f32 %v312, %v366
    %v387 = vmax.f32 %v313, %v368
    %v388 = vmax.f32 %v314, %v370
    %v389 = vmax.f32 %v315, %v372
    %v390 = vmax.f32 %v316, %v374
    %391 = vst.msk [vmem:[%s1 + $0x2] sm:$0x1] %vm146, %v383
    %392 = vst.msk [vmem:[%s1 + $0xa] sm:$0x1] %vm146, %v384
    %393 = vst.msk [vmem:[%s1 + $0x12] sm:$0x1] %vm146, %v385
    %394 = vst.msk [vmem:[%s1 + $0x1a] sm:$0x1] %vm146, %v386
    %395 = vst.msk [vmem:[%s1 + $0x22] sm:$0x1] %vm146, %v387
    %396 = vst.msk [vmem:[%s1 + $0x2a] sm:$0x1] %vm146, %v388
    %397 = vst.msk [vmem:[%s1 + $0x32] sm:$0x1] %vm146, %v389
    %398 = vst.msk [vmem:[%s1 + $0x3a] sm:$0x1] %vm146, %v390
    %v399 = vld [vmem:[#allocation2 + $0x9] sm:$0x1]
    %v400 = vld [vmem:[#allocation2 + $0x19] sm:$0x1]
    %v401 = vld [vmem:[#allocation2 + $0x29] sm:$0x1]
    %v402 = vld [vmem:[#allocation2 + $0x39] sm:$0x1]
    %v403 = vld [vmem:[#allocation2 + $0x49] sm:$0x1]
    %v404 = vld [vmem:[#allocation2 + $0x59] sm:$0x1]
    %v405 = vld [vmem:[#allocation2 + $0x69] sm:$0x1]
    %v406 = vld [vmem:[#allocation2 + $0x79] sm:$0x1]
    %v407 = vld [vmem:[#allocation2 + $0xa] sm:$0x1]
    %v408 = vld [vmem:[#allocation2 + $0x1a] sm:$0x1]
    %v409 = vld [vmem:[#allocation2 + $0x2a] sm:$0x1]
    %v410 = vld [vmem:[#allocation2 + $0x3a] sm:$0x1]
    %v411 = vld [vmem:[#allocation2 + $0x4a] sm:$0x1]
    %v412 = vld [vmem:[#allocation2 + $0x5a] sm:$0x1]
    %v413 = vld [vmem:[#allocation2 + $0x6a] sm:$0x1]
    %v414 = vld [vmem:[#allocation2 + $0x7a] sm:$0x1]
    %v415 = vld [vmem:[#allocation2 + $0xb] sm:$0x1]
    %v416 = vld [vmem:[#allocation2 + $0x1b] sm:$0x1]
    %v417 = vld [vmem:[#allocation2 + $0x2b] sm:$0x1]
    %v418 = vld [vmem:[#allocation2 + $0x3b] sm:$0x1]
    %v419 = vld [vmem:[#allocation2 + $0x4b] sm:$0x1]
    %v420 = vld [vmem:[#allocation2 + $0x5b] sm:$0x1]
    %v421 = vld [vmem:[#allocation2 + $0x6b] sm:$0x1]
    %v422 = vld [vmem:[#allocation2 + $0x7b] sm:$0x1]
    %v423 = vmax.f32 %v399, %v407
    %v424 = vmax.f32 %v400, %v408
    %v425 = vmax.f32 %v401, %v409
    %v426 = vmax.f32 %v402, %v410
    %v427 = vmax.f32 %v403, %v411
    %v428 = vmax.f32 %v404, %v412
    %v429 = vmax.f32 %v405, %v413
    %v430 = vmax.f32 %v406, %v414
    %v431 = vmax.f32 %v423, %v415
    %v432 = vmax.f32 %v424, %v416
    %v433 = vmax.f32 %v425, %v417
    %v434 = vmax.f32 %v426, %v418
    %v435 = vmax.f32 %v427, %v419
    %v436 = vmax.f32 %v428, %v420
    %v437 = vmax.f32 %v429, %v421
    %v438 = vmax.f32 %v430, %v422
    %v447 = vrot.slane %v432, 7
    %v448 = vsel %vm73, %v447, %v431
    %v449 = vrot.slane %v433, 6
    %v450 = vsel %vm76, %v449, %v448
    %v451 = vrot.slane %v434, 5
    %v452 = vsel %vm79, %v451, %v450
    %v453 = vrot.slane %v435, 4
    %v454 = vsel %vm82, %v453, %v452
    %v455 = vrot.slane %v436, 3
    %v456 = vsel %vm85, %v455, %v454
    %v457 = vrot.slane %v437, 2
    %v458 = vsel %vm88, %v457, %v456
    %v459 = vrot.slane %v438, 1
    %v460 = vsel %vm91, %v459, %v458
    %462 = vrot.lane.b32.xlu0 %v460, 16
    %v463 = vpop.permute.xlu0 %462
    %v464 = vsel %vm94, %v463, %v460
    %465 = vrot.lane.b32.xlu0 %v464, 16
    %v466 = vpop.permute.xlu0 %465
    %v467 = vsel %vm94, %v466, %v460
    %469 = vrot.lane.b32.xlu0 %v467, 14
    %v470 = vpop.permute.xlu0 %469
    %v472 = vmax.f32 %v467, %v470
    %v474 = vrot.slane %v472, 1
    %v475 = vrot.slane %v472, 2
    %v476 = vrot.slane %v472, 3
    %v477 = vrot.slane %v472, 4
    %v478 = vrot.slane %v472, 5
    %v479 = vrot.slane %v472, 6
    %v480 = vrot.slane %v472, 7
    %481 = vrot.lane.b32.xlu0 %v472, 113
    %v482 = vpop.permute.xlu0 %481
    %483 = vrot.lane.b32.xlu0 %v474, 113
    %v484 = vpop.permute.xlu0 %483
    %485 = vrot.lane.b32.xlu0 %v475, 113
    %v486 = vpop.permute.xlu0 %485
    %487 = vrot.lane.b32.xlu0 %v476, 113
    %v488 = vpop.permute.xlu0 %487
    %489 = vrot.lane.b32.xlu0 %v477, 113
    %v490 = vpop.permute.xlu0 %489
    %491 = vrot.lane.b32.xlu0 %v478, 113
    %v492 = vpop.permute.xlu0 %491
    %493 = vrot.lane.b32.xlu0 %v479, 113
    %v494 = vpop.permute.xlu0 %493
    %495 = vrot.lane.b32.xlu0 %v480, 113
    %v496 = vpop.permute.xlu0 %495
    %v505 = vmax.f32 %v431, %v482
    %v506 = vmax.f32 %v432, %v484
    %v507 = vmax.f32 %v433, %v486
    %v508 = vmax.f32 %v434, %v488
    %v509 = vmax.f32 %v435, %v490
    %v510 = vmax.f32 %v436, %v492
    %v511 = vmax.f32 %v437, %v494
    %v512 = vmax.f32 %v438, %v496
    %513 = vst.msk [vmem:[%s1 + $0x3] sm:$0x1] %vm146, %v505
    %514 = vst.msk [vmem:[%s1 + $0xb] sm:$0x1] %vm146, %v506
    %515 = vst.msk [vmem:[%s1 + $0x13] sm:$0x1] %vm146, %v507
    %516 = vst.msk [vmem:[%s1 + $0x1b] sm:$0x1] %vm146, %v508
    %517 = vst.msk [vmem:[%s1 + $0x23] sm:$0x1] %vm146, %v509
    %518 = vst.msk [vmem:[%s1 + $0x2b] sm:$0x1] %vm146, %v510
    %519 = vst.msk [vmem:[%s1 + $0x33] sm:$0x1] %vm146, %v511
    %520 = vst.msk [vmem:[%s1 + $0x3b] sm:$0x1] %vm146, %v512
    %v521 = vld [vmem:[#allocation2 + $0xc] sm:$0x1]
    %v522 = vld [vmem:[#allocation2 + $0x1c] sm:$0x1]
    %v523 = vld [vmem:[#allocation2 + $0x2c] sm:$0x1]
    %v524 = vld [vmem:[#allocation2 + $0x3c] sm:$0x1]
    %v525 = vld [vmem:[#allocation2 + $0x4c] sm:$0x1]
    %v526 = vld [vmem:[#allocation2 + $0x5c] sm:$0x1]
    %v527 = vld [vmem:[#allocation2 + $0x6c] sm:$0x1]
    %v528 = vld [vmem:[#allocation2 + $0x7c] sm:$0x1]
    %v529 = vld [vmem:[#allocation2 + $0xd] sm:$0x1]
    %v530 = vld [vmem:[#allocation2 + $0x1d] sm:$0x1]
    %v531 = vld [vmem:[#allocation2 + $0x2d] sm:$0x1]
    %v532 = vld [vmem:[#allocation2 + $0x3d] sm:$0x1]
    %v533 = vld [vmem:[#allocation2 + $0x4d] sm:$0x1]
    %v534 = vld [vmem:[#allocation2 + $0x5d] sm:$0x1]
    %v535 = vld [vmem:[#allocation2 + $0x6d] sm:$0x1]
    %v536 = vld [vmem:[#allocation2 + $0x7d] sm:$0x1]
    %v537 = vld [vmem:[#allocation2 + $0xe] sm:$0x1]
    %v538 = vld [vmem:[#allocation2 + $0x1e] sm:$0x1]
    %v539 = vld [vmem:[#allocation2 + $0x2e] sm:$0x1]
    %v540 = vld [vmem:[#allocation2 + $0x3e] sm:$0x1]
    %v541 = vld [vmem:[#allocation2 + $0x4e] sm:$0x1]
    %v542 = vld [vmem:[#allocation2 + $0x5e] sm:$0x1]
    %v543 = vld [vmem:[#allocation2 + $0x6e] sm:$0x1]
    %v544 = vld [vmem:[#allocation2 + $0x7e] sm:$0x1]
    %v545 = vmax.f32 %v521, %v529
    %v546 = vmax.f32 %v522, %v530
    %v547 = vmax.f32 %v523, %v531
    %v548 = vmax.f32 %v524, %v532
    %v549 = vmax.f32 %v525, %v533
    %v550 = vmax.f32 %v526, %v534
    %v551 = vmax.f32 %v527, %v535
    %v552 = vmax.f32 %v528, %v536
    %v553 = vmax.f32 %v545, %v537
    %v554 = vmax.f32 %v546, %v538
    %v555 = vmax.f32 %v547, %v539
    %v556 = vmax.f32 %v548, %v540
    %v557 = vmax.f32 %v549, %v541
    %v558 = vmax.f32 %v550, %v542
    %v559 = vmax.f32 %v551, %v543
    %v560 = vmax.f32 %v552, %v544
    %v569 = vrot.slane %v554, 7
    %v570 = vsel %vm73, %v569, %v553
    %v571 = vrot.slane %v555, 6
    %v572 = vsel %vm76, %v571, %v570
    %v573 = vrot.slane %v556, 5
    %v574 = vsel %vm79, %v573, %v572
    %v575 = vrot.slane %v557, 4
    %v576 = vsel %vm82, %v575, %v574
    %v577 = vrot.slane %v558, 3
    %v578 = vsel %vm85, %v577, %v576
    %v579 = vrot.slane %v559, 2
    %v580 = vsel %vm88, %v579, %v578
    %v581 = vrot.slane %v560, 1
    %v582 = vsel %vm91, %v581, %v580
    %584 = vrot.lane.b32.xlu0 %v582, 16
    %v585 = vpop.permute.xlu0 %584
    %v586 = vsel %vm94, %v585, %v582
    %587 = vrot.lane.b32.xlu0 %v586, 16
    %v588 = vpop.permute.xlu0 %587
    %v589 = vsel %vm94, %v588, %v582
    %591 = vrot.lane.b32.xlu0 %v589, 14
    %v592 = vpop.permute.xlu0 %591
    %v594 = vmax.f32 %v589, %v592
    %v596 = vrot.slane %v594, 1
    %v597 = vrot.slane %v594, 2
    %v598 = vrot.slane %v594, 3
    %v599 = vrot.slane %v594, 4
    %v600 = vrot.slane %v594, 5
    %v601 = vrot.slane %v594, 6
    %v602 = vrot.slane %v594, 7
    %603 = vrot.lane.b32.xlu0 %v594, 113
    %v604 = vpop.permute.xlu0 %603
    %605 = vrot.lane.b32.xlu0 %v596, 113
    %v606 = vpop.permute.xlu0 %605
    %607 = vrot.lane.b32.xlu0 %v597, 113
    %v608 = vpop.permute.xlu0 %607
    %609 = vrot.lane.b32.xlu0 %v598, 113
    %v610 = vpop.permute.xlu0 %609
    %611 = vrot.lane.b32.xlu0 %v599, 113
    %v612 = vpop.permute.xlu0 %611
    %613 = vrot.lane.b32.xlu0 %v600, 113
    %v614 = vpop.permute.xlu0 %613
    %615 = vrot.lane.b32.xlu0 %v601, 113
    %v616 = vpop.permute.xlu0 %615
    %617 = vrot.lane.b32.xlu0 %v602, 113
    %v618 = vpop.permute.xlu0 %617
    %v627 = vmax.f32 %v553, %v604
    %v628 = vmax.f32 %v554, %v606
    %v629 = vmax.f32 %v555, %v608
    %v630 = vmax.f32 %v556, %v610
    %v631 = vmax.f32 %v557, %v612
    %v632 = vmax.f32 %v558, %v614
    %v633 = vmax.f32 %v559, %v616
    %v634 = vmax.f32 %v560, %v618
    %635 = vst.msk [vmem:[%s1 + $0x4] sm:$0x1] %vm146, %v627
    %636 = vst.msk [vmem:[%s1 + $0xc] sm:$0x1] %vm146, %v628
    %637 = vst.msk [vmem:[%s1 + $0x14] sm:$0x1] %vm146, %v629
    %638 = vst.msk [vmem:[%s1 + $0x1c] sm:$0x1] %vm146, %v630
    %639 = vst.msk [vmem:[%s1 + $0x24] sm:$0x1] %vm146, %v631
    %640 = vst.msk [vmem:[%s1 + $0x2c] sm:$0x1] %vm146, %v632
    %641 = vst.msk [vmem:[%s1 + $0x34] sm:$0x1] %vm146, %v633
    %642 = vst.msk [vmem:[%s1 + $0x3c] sm:$0x1] %vm146, %v634
    // Predicated region
    $region10: #{tpu_custom_call.1} parent=1 // pred_check
      _
    $region11: #{tpu_custom_call.1} parent=1 // pred_check_branch
      %644 = sbr.rel (0) target = $region13
    $region12: #{tpu_custom_call.1} parent=1 // pred_region
      _
    $region13: #{tpu_custom_call.1} parent=1 // pred_fallthru
      _
    // Predicated region
    $region14: #{tpu_custom_call.1} parent=1 // pred_check
      _
    $region15: #{tpu_custom_call.1} parent=1 // pred_check_branch
      %646 = sbr.rel (0) target = $region17
    $region16: #{tpu_custom_call.1} parent=1 // pred_region
      _
    $region17: #{tpu_custom_call.1} parent=1 // pred_fallthru
      _
    %647 = vsyncpa [#allocation3], 1

</llo_original>
